<compile_context>
chip_gen: v5e
topology: v5e:2x2
jax: 0.10.0
libtpu: 0.0.40
codegen_flags: <defaults>
</compile_context>

<pallas_src>
import jax
import jax.numpy as jnp
from jax.experimental import pallas as pl
from jax.experimental.pallas import tpu as pltpu

EMB_DIM = 128                 # embedding dimension (matches bieber-gpt)
HIDDEN = 4 * EMB_DIM          # 512


# ----------------------------------------------------------------------------
# Fused FFN kernel: one row-tile of tokens through both linears + ReLU.
#   x:  (bm, C)       row tile of flattened tokens
#   w1: (C, 4C)  b1: (1, 4C)
#   w2: (4C, C)  b2: (1, C)
#   o:  (bm, C)
# ----------------------------------------------------------------------------
def _ffn_kernel(x_ref, w1_ref, b1_ref, w2_ref, b2_ref, o_ref):
    x = x_ref[...]                                                      # (bm, C)
    h = jnp.dot(x, w1_ref[...], preferred_element_type=jnp.float32)    # (bm, 4C)
    h = h + b1_ref[...]                                                 # (1,4C) bcast
    h = jnp.maximum(h, 0.0)                                             # ReLU
    y = jnp.dot(h.astype(w2_ref.dtype), w2_ref[...],
                preferred_element_type=jnp.float32)                     # (bm, C)
    y = y + b2_ref[...]
    # Dropout is identity in eval mode.
    o_ref[...] = y.astype(o_ref.dtype)


def _choose_block_m(m):
    """Largest row tile (multiple of 8, <=256) dividing m; prefer >=2 grid steps."""
    candidates = (256, 128, 64, 32, 16, 8)
    for bm in candidates:
        if m % bm == 0 and m // bm >= 2:
            return bm
    for bm in candidates:
        if m % bm == 0:
            return bm
    return m


def feedforward(x, w1, b1, w2, b2):
    """x: (B, T, C); w1: (C, 4C); b1: (4C,); w2: (4C, C); b2: (C,).

    Weights are stored pre-transposed relative to PyTorch nn.Linear (which
    keeps (out, in) and computes x @ W.T + b), so the kernel does x @ W + b.
    """
    B, T, C = x.shape
    assert C == w1.shape[0] and w1.shape[1] == w2.shape[0] and w2.shape[1] == C
    H = w1.shape[1]

    m = B * T
    x2 = x.reshape(m, C)

    # Pad rows to a multiple of 8 (sublane) if needed.
    m_pad = ((m + 7) // 8) * 8
    if m_pad != m:
        x2 = jnp.pad(x2, ((0, m_pad - m), (0, 0)))

    bm = _choose_block_m(m_pad)
    grid = (m_pad // bm,)

    out2 = pl.pallas_call(
        _ffn_kernel,
        out_shape=jax.ShapeDtypeStruct((m_pad, C), x.dtype),
        grid_spec=pltpu.PrefetchScalarGridSpec(
            num_scalar_prefetch=0,
            grid=grid,
            in_specs=[
                pl.BlockSpec((bm, C), lambda i: (i, 0)),    # x rows
                pl.BlockSpec((C, H), lambda i: (0, 0)),     # W1 (VMEM-resident)
                pl.BlockSpec((1, H), lambda i: (0, 0)),     # b1
                pl.BlockSpec((H, C), lambda i: (0, 0)),     # W2 (VMEM-resident)
                pl.BlockSpec((1, C), lambda i: (0, 0)),     # b2
            ],
            out_specs=pl.BlockSpec((bm, C), lambda i: (i, 0)),
        ),
        compiler_params=pltpu.CompilerParams(
            dimension_semantics=("parallel",)),
    )(x2, w1, b1.reshape(1, H), w2, b2.reshape(1, C))

    if m_pad != m:
        out2 = out2[:m]
    return out2.reshape(B, T, C)


if __name__ == "__main__":
    key = jax.random.PRNGKey(0)
    k_x, k_w1, k_b1, k_w2, k_b2 = jax.random.split(key, 5)

    B, T, C, H = 2, 8, EMB_DIM, HIDDEN

    x = jax.random.normal(k_x, (B, T, C), dtype=jnp.float32)

    # Deterministic synthetic parameters (pre-transposed to x @ W layout).
    w1 = 0.02 * jax.random.normal(k_w1, (C, H), dtype=jnp.float32)
    b1 = 0.02 * jax.random.normal(k_b1, (H,), dtype=jnp.float32)
    w2 = 0.02 * jax.random.normal(k_w2, (H, C), dtype=jnp.float32)
    b2 = 0.02 * jax.random.normal(k_b2, (C,), dtype=jnp.float32)

    out = feedforward(x, w1, b1, w2, b2)
    jax.block_until_ready(out)
    assert out.shape == (B, T, C)

    # Pure-JAX reference (eval-mode FeedForward) for a sanity check.
    ref = jnp.maximum(x.reshape(-1, C) @ w1 + b1, 0.0) @ w2 + b2
    ref = ref.reshape(B, T, C)
    assert jnp.allclose(out, ref, rtol=1e-2, atol=1e-2), "mismatch vs reference"

    print("KERNEL_OK")
</pallas_src>

<mosaic_0001>
module attributes {stable_mosaic.version = 11 : i64} {
  func.func @_ffn_kernel(%arg0: i32, %arg1: memref<8x128xf32, #tpu.memory_space<vmem>>, %arg2: memref<128x512xf32, #tpu.memory_space<vmem>>, %arg3: memref<1x512xf32, #tpu.memory_space<vmem>>, %arg4: memref<512x128xf32, #tpu.memory_space<vmem>>, %arg5: memref<1x128xf32, #tpu.memory_space<vmem>>, %arg6: memref<8x128xf32, #tpu.memory_space<vmem>>) attributes {dimension_semantics = [#tpu.dimension_semantics<parallel>], iteration_bounds = array<i64: 2>, scalar_prefetch = 0 : i64, scratch_operands = 0 : i64, tpu.core_type = #tpu.core_type<tc>, window_params = [{transform_indices = @transform_0, window_bounds = array<i64: 8, 128>}, {pipeline_mode = #tpu.pipeline_mode<synchronous>, transform_indices = @transform_1, window_bounds = array<i64: 128, 512>}, {pipeline_mode = #tpu.pipeline_mode<synchronous>, transform_indices = @transform_2, window_bounds = array<i64: 1, 512>}, {pipeline_mode = #tpu.pipeline_mode<synchronous>, transform_indices = @transform_3, window_bounds = array<i64: 512, 128>}, {pipeline_mode = #tpu.pipeline_mode<synchronous>, transform_indices = @transform_4, window_bounds = array<i64: 1, 128>}, {transform_indices = @transform_5, window_bounds = array<i64: 8, 128>}]} {
    %c0 = arith.constant 0 : index
    %c0_0 = arith.constant 0 : index
    %0 = vector.load %arg1[%c0, %c0_0] : memref<8x128xf32, #tpu.memory_space<vmem>>, vector<8x128xf32>
    %c0_1 = arith.constant 0 : index
    %c0_2 = arith.constant 0 : index
    %1 = vector.load %arg2[%c0_1, %c0_2] : memref<128x512xf32, #tpu.memory_space<vmem>>, vector<128x512xf32>
    %cst = arith.constant dense<0.000000e+00> : vector<8x512xf32>
    %2 = tpu.matmul %0, %1, %cst {dimension_numbers = #tpu.dot_dimension_numbers<[1], [0], [0], [1], [0, 0, 1, 1], [], []>} : vector<8x128xf32>, vector<128x512xf32>, vector<8x512xf32> -> vector<8x512xf32>
    %c0_3 = arith.constant 0 : index
    %c0_4 = arith.constant 0 : index
    %3 = vector.load %arg3[%c0_3, %c0_4] : memref<1x512xf32, #tpu.memory_space<vmem>>, vector<1x512xf32>
    %4 = vector.broadcast %3 : vector<1x512xf32> to vector<8x512xf32>
    %5 = arith.addf %2, %4 : vector<8x512xf32>
    %cst_5 = arith.constant 0.000000e+00 : f32
    %6 = vector.broadcast %cst_5 : f32 to vector<8x512xf32>
    %7 = arith.maximumf %5, %6 : vector<8x512xf32>
    %c0_6 = arith.constant 0 : index
    %c0_7 = arith.constant 0 : index
    %8 = vector.load %arg4[%c0_6, %c0_7] : memref<512x128xf32, #tpu.memory_space<vmem>>, vector<512x128xf32>
    %cst_8 = arith.constant dense<0.000000e+00> : vector<8x128xf32>
    %9 = tpu.matmul %7, %8, %cst_8 {dimension_numbers = #tpu.dot_dimension_numbers<[1], [0], [0], [1], [0, 0, 1, 1], [], []>} : vector<8x512xf32>, vector<512x128xf32>, vector<8x128xf32> -> vector<8x128xf32>
    %c0_9 = arith.constant 0 : index
    %c0_10 = arith.constant 0 : index
    %10 = vector.load %arg5[%c0_9, %c0_10] : memref<1x128xf32, #tpu.memory_space<vmem>>, vector<1x128xf32>
    %11 = vector.broadcast %10 : vector<1x128xf32> to vector<8x128xf32>
    %12 = arith.addf %9, %11 : vector<8x128xf32>
    %c0_11 = arith.constant 0 : index
    %c0_12 = arith.constant 0 : index
    %13 = vector.load %arg6[%c0_11, %c0_12] : memref<8x128xf32, #tpu.memory_space<vmem>>, vector<8x128xf32>
    tpu.vector_store %arg6[%c0_11, %c0_12], %12 {strides = array<i32>} : memref<8x128xf32, #tpu.memory_space<vmem>>, vector<8x128xf32>,
    return
  }
  func.func @transform_0(%arg0: i32) -> (i32, i32) {
    %c0_i32 = arith.constant 0 : i32
    %c0_i32_0 = arith.constant 0 : i32
    return %arg0, %c0_i32 : i32, i32
  }
  func.func @transform_1(%arg0: i32) -> (i32, i32) {
    %c0_i32 = arith.constant 0 : i32
    %c0_i32_0 = arith.constant 0 : i32
    %c0_i32_1 = arith.constant 0 : i32
    return %c0_i32, %c0_i32_0 : i32, i32
  }
  func.func @transform_2(%arg0: i32) -> (i32, i32) {
    %c0_i32 = arith.constant 0 : i32
    %c0_i32_0 = arith.constant 0 : i32
    %c0_i32_1 = arith.constant 0 : i32
    return %c0_i32, %c0_i32_0 : i32, i32
  }
  func.func @transform_3(%arg0: i32) -> (i32, i32) {
    %c0_i32 = arith.constant 0 : i32
    %c0_i32_0 = arith.constant 0 : i32
    %c0_i32_1 = arith.constant 0 : i32
    return %c0_i32, %c0_i32_0 : i32, i32
  }
  func.func @transform_4(%arg0: i32) -> (i32, i32) {
    %c0_i32 = arith.constant 0 : i32
    %c0_i32_0 = arith.constant 0 : i32
    %c0_i32_1 = arith.constant 0 : i32
    return %c0_i32, %c0_i32_0 : i32, i32
  }
  func.func @transform_5(%arg0: i32) -> (i32, i32) {
    %c0_i32 = arith.constant 0 : i32
    %c0_i32_0 = arith.constant 0 : i32
    return %arg0, %c0_i32 : i32, i32
  }
}

</mosaic_0001>

<llo_original>
// kernel: tpu_custom_call.1
$region0: #{tpu_custom_call.1}
  #allocation0 [shape = 'u32[]', space=smem, size = 0x4, offset = 0x4, fixed_abs, tag = 'smem constant byte address 0x4 - core index']
  #allocation1 [shape = 'u32[72,128]{1,0:T(1,128)}', space=vmem, size = 0x9000, scoped, tag = 'internal scratch']
  %s0 = inlined_call_operand.hbm [shape: f32[16,128], index: 0, kind: input, shape index: {}]
  %s1 = inlined_call_operand.hbm [shape: f32[128,512], index: 1, kind: input, shape index: {}]
  %s2 = inlined_call_operand.hbm [shape: f32[1,512], index: 2, kind: input, shape index: {}]
  %s3 = inlined_call_operand.hbm [shape: f32[512,128], index: 3, kind: input, shape index: {}]
  %s4 = inlined_call_operand.vmem [shape: f32[1,128], index: 4, kind: input, shape index: {}]
  %s5 = inlined_call_operand.hbm [shape: f32[16,128], index: 5, kind: output, shape index: {}]
  %s6 = sld [smem:[#allocation0]]
  $region69: #{tpu_custom_call.1} parent=0
    _
  %s8 = ssub.s32 1, %s6
  %s9 = scalar_select 0, %s8, %s6
  $region1: #{tpu_custom_call.1} parent=0
    #allocation2 [shape = 'u8[8192]{0}', space=vmem, size = 0x2000, scoped, tag = 'input window, operand 0']
    #allocation3 [shape = 's32[2]{0}', space=sflag, size = 0x8, scoped, tag = 'scoped memory for tpu_custom_call.1']
    #allocation4 [shape = 's32[2]{0}', space=sflag, size = 0x8, scoped, tag = 'scoped memory for tpu_custom_call.1']
    #allocation5 [shape = 'u8[262144]{0}', space=vmem, size = 0x40000, scoped, tag = 'input window, operand 1, single buffered']
    #allocation6 [shape = 's32[1]{0}', space=sflag, size = 0x4, scoped, tag = 'scoped memory for tpu_custom_call.1']
    #allocation7 [shape = 'u8[2048]{0}', space=vmem, size = 0x800, scoped, tag = 'input window, operand 2, single buffered']
    #allocation8 [shape = 'u8[262144]{0}', space=vmem, size = 0x40000, scoped, tag = 'input window, operand 3, single buffered']
    #allocation9 [shape = 's32[1]{0}', space=sflag, size = 0x4, scoped, tag = 'scoped memory for tpu_custom_call.1']
    #allocation10 [shape = 'u8[8192]{0}', space=vmem, size = 0x2000, scoped, tag = 'output window, operand 0']
    %10 = vsyncpa [#allocation3], 0
    %s11 = scalar_lea.sflag [#allocation3], 1
    %12 = vsyncpa %s11, 0
    %13 = vsyncpa [#allocation6], 0
    %14 = vsyncpa [#allocation9], 0
    %15 = vsyncpa [#allocation4], 0
    %s16 = scalar_lea.sflag [#allocation4], 1
    %17 = vsyncpa %s16, 0
    loop: start=0, step=1, limit=4
    $region2: #{tpu_custom_call.1} parent=1 // loop_pre_header
      _
    $region3: #{tpu_custom_call.1} parent=1 // loop_header
      %s19 = sphi 0, %s23
      %p20 = scmp.ge.s32.totalorder %s19, 4
      %s29 = sphi 0, %s31
      %s32 = sphi 0, %s29
      %s33 = sphi 0, %s32
      %s49 = sphi 0, %s33
      %s53 = sphi 0, %s53
      %s55 = sphi 0, %s53
      %s56 = sphi 0, %s55
      %s70 = sphi 0, %s56
      %s74 = sphi 0, %s74
      %s76 = sphi 0, %s74
      %s77 = sphi 0, %s76
      %s91 = sphi 0, %s77
      %s95 = sphi 0, %s95
      %s97 = sphi 0, %s95
      %s98 = sphi 0, %s97
      %s112 = sphi 0, %s98
      %s116 = sphi 0, %s116
      %s118 = sphi 0, %s116
      %s119 = sphi 0, %s118
      %s133 = sphi 0, %s119
      %s139 = sphi 0, %s141
      %s142 = sphi 0, %s139
      %s143 = sphi 0, %s142
      %s159 = sphi 0, %s143
    $region4: #{tpu_custom_call.1} parent=1 // loop_header_branch
      %22 = sbr.rel (%p20) target = $region8
    $region5: #{tpu_custom_call.1} parent=1 // loop_body
      %s24 = ssub.s32 %s19, 1
      %s25 = ssub.s32 %s19, 2
      %s26 = sadd.s32 %s19, 1
      %s27 = ssub.s32 %s19, %s26
      %p28 = scmp.eq.s32.totalorder %s27, 0
      %s30 = sadd.s32 %s29, 1
      %s31 = scalar_select %p28, %s29, %s30
      %p34 = pneg %p28
      %p35 = scmp.eq.s32.totalorder %s19, 1
      %p36 = por %p34, %p35
      %p37 = scmp.ne.s32.totalorder %s29, %s32
      %p38 = scmp.eq.s32.totalorder %s19, 0
      %p39 = por %p37, %p38
      %p40 = scmp.ne.s32.totalorder %s29, %s32
      %p41 = scmp.eq.s32.totalorder %s24, 1
      %p42 = por %p40, %p41
      %p43 = scmp.ne.s32.totalorder %s32, %s33
      %p44 = scmp.eq.s32.totalorder %s24, 0
      %p45 = por %p43, %p44
      %p46 = scmp.ne.s32.totalorder %s32, %s33
      %p47 = scmp.eq.s32.totalorder %s25, 1
      %p48 = por %p46, %p47
      %p50 = scmp.ne.s32.totalorder %s33, %s49
      %p51 = scmp.eq.s32.totalorder %s25, 0
      %p52 = por %p50, %p51
      %s54 = sadd.s32 %s53, 1
      %p57 = scmp.eq.s32.totalorder %s19, 1
      %p58 = scmp.ne.s32.totalorder %s53, %s55
      %p59 = scmp.eq.s32.totalorder %s19, 0
      %p60 = por %p58, %p59
      %p61 = scmp.ne.s32.totalorder %s53, %s55
      %p62 = scmp.eq.s32.totalorder %s24, 1
      %p63 = por %p61, %p62
      %p64 = scmp.ne.s32.totalorder %s55, %s56
      %p65 = scmp.eq.s32.totalorder %s24, 0
      %p66 = por %p64, %p65
      %p67 = scmp.ne.s32.totalorder %s55, %s56
      %p68 = scmp.eq.s32.totalorder %s25, 1
      %p69 = por %p67, %p68
      %p71 = scmp.ne.s32.totalorder %s56, %s70
      %p72 = scmp.eq.s32.totalorder %s25, 0
      %p73 = por %p71, %p72
      %s75 = sadd.s32 %s74, 1
      %p78 = scmp.eq.s32.totalorder %s19, 1
      %p79 = scmp.ne.s32.totalorder %s74, %s76
      %p80 = scmp.eq.s32.totalorder %s19, 0
      %p81 = por %p79, %p80
      %p82 = scmp.ne.s32.totalorder %s74, %s76
      %p83 = scmp.eq.s32.totalorder %s24, 1
      %p84 = por %p82, %p83
      %p85 = scmp.ne.s32.totalorder %s76, %s77
      %p86 = scmp.eq.s32.totalorder %s24, 0
      %p87 = por %p85, %p86
      %p88 = scmp.ne.s32.totalorder %s76, %s77
      %p89 = scmp.eq.s32.totalorder %s25, 1
      %p90 = por %p88, %p89
      %p92 = scmp.ne.s32.totalorder %s77, %s91
      %p93 = scmp.eq.s32.totalorder %s25, 0
      %p94 = por %p92, %p93
      %s96 = sadd.s32 %s95, 1
      %p99 = scmp.eq.s32.totalorder %s19, 1
      %p100 = scmp.ne.s32.totalorder %s95, %s97
      %p101 = scmp.eq.s32.totalorder %s19, 0
      %p102 = por %p100, %p101
      %p103 = scmp.ne.s32.totalorder %s95, %s97
      %p104 = scmp.eq.s32.totalorder %s24, 1
      %p105 = por %p103, %p104
      %p106 = scmp.ne.s32.totalorder %s97, %s98
      %p107 = scmp.eq.s32.totalorder %s24, 0
      %p108 = por %p106, %p107
      %p109 = scmp.ne.s32.totalorder %s97, %s98
      %p110 = scmp.eq.s32.totalorder %s25, 1
      %p111 = por %p109, %p110
      %p113 = scmp.ne.s32.totalorder %s98, %s112
      %p114 = scmp.eq.s32.totalorder %s25, 0
      %p115 = por %p113, %p114
      %s117 = sadd.s32 %s116, 1
      %p120 = scmp.eq.s32.totalorder %s19, 1
      %p121 = scmp.ne.s32.totalorder %s116, %s118
      %p122 = scmp.eq.s32.totalorder %s19, 0
      %p123 = por %p121, %p122
      %p124 = scmp.ne.s32.totalorder %s116, %s118
      %p125 = scmp.eq.s32.totalorder %s24, 1
      %p126 = por %p124, %p125
      %p127 = scmp.ne.s32.totalorder %s118, %s119
      %p128 = scmp.eq.s32.totalorder %s24, 0
      %p129 = por %p127, %p128
      %p130 = scmp.ne.s32.totalorder %s118, %s119
      %p131 = scmp.eq.s32.totalorder %s25, 1
      %p132 = por %p130, %p131
      %p134 = scmp.ne.s32.totalorder %s119, %s133
      %p135 = scmp.eq.s32.totalorder %s25, 0
      %p136 = por %p134, %p135
      %s137 = ssub.s32 %s19, %s26
      %p138 = scmp.eq.s32.totalorder %s137, 0
      %s140 = sadd.s32 %s139, 1
      %s141 = scalar_select %p138, %s139, %s140
      %p144 = pneg %p138
      %p145 = scmp.eq.s32.totalorder %s19, 1
      %p146 = por %p144, %p145
      %p147 = scmp.ne.s32.totalorder %s139, %s142
      %p148 = scmp.eq.s32.totalorder %s19, 0
      %p149 = por %p147, %p148
      %p150 = scmp.ne.s32.totalorder %s139, %s142
      %p151 = scmp.eq.s32.totalorder %s24, 1
      %p152 = por %p150, %p151
      %p153 = scmp.ne.s32.totalorder %s142, %s143
      %p154 = scmp.eq.s32.totalorder %s24, 0
      %p155 = por %p153, %p154
      %p156 = scmp.ne.s32.totalorder %s142, %s143
      %p157 = scmp.eq.s32.totalorder %s25, 1
      %p158 = por %p156, %p157
      %p160 = scmp.ne.s32.totalorder %s143, %s159
      %p161 = scmp.eq.s32.totalorder %s25, 0
      %p162 = por %p160, %p161
      %p163 = scmp.le.s32.totalorder 1, %s19
      %p164 = scmp.lt.s32.totalorder %s19, 3
      %p165 = pnand %p163, %p164
      %p166 = pneg %p165
      // Predicated region
      $region9: #{tpu_custom_call.1} parent=5 // pred_check
        _
      $region10: #{tpu_custom_call.1} parent=5 // pred_check_branch
        %168 = sbr.rel (%p165) target = $region12
      $region11: #{tpu_custom_call.1} parent=5 // pred_region
        %s169 = ssub.s32 %s19, 1
        // Predicated region
        $region13: #{tpu_custom_call.1} parent=11 // pred_check
          %p170 = pneg %p66
        $region14: #{tpu_custom_call.1} parent=11 // pred_check_branch
          %172 = sbr.rel (%p170) target = $region16
        $region15: #{tpu_custom_call.1} parent=11 // pred_region
          %174 = vsyncadd [#allocation6], 0
          %s175 = sshll.u32 %s1, 4
          %s176 = int_to_ptr.hbm [resolvable:$true] %s175
          %s177 = sshll.u32 [#allocation5], 4
          %s178 = int_to_ptr.vmem [resolvable:$true] %s177
          %183 = dma.hbm_to_vmem [thread:$0]  %s176, 8192, %s178, [#allocation6], 512, 512, 32
        $region16: #{tpu_custom_call.1} parent=11 // pred_fallthru
          _
        // Predicated region
        $region17: #{tpu_custom_call.1} parent=11 // pred_check
          %p184 = pneg %p87
        $region18: #{tpu_custom_call.1} parent=11 // pred_check_branch
          %186 = sbr.rel (%p184) target = $region20
        $region19: #{tpu_custom_call.1} parent=11 // pred_region
          %188 = vsyncadd [#allocation6], 0
          %s190 = sshll.u32 %s2, 4
          %s191 = int_to_ptr.hbm [resolvable:$true] %s190
          %s192 = sshll.u32 [#allocation7], 4
          %s193 = int_to_ptr.vmem [resolvable:$true] %s192
          %195 = dma.hbm_to_vmem [thread:$0]  %s191, 64, %s193, [#allocation6]
        $region20: #{tpu_custom_call.1} parent=11 // pred_fallthru
          _
        // Predicated region
        $region21: #{tpu_custom_call.1} parent=11 // pred_check
          %p196 = pneg %p108
        $region22: #{tpu_custom_call.1} parent=11 // pred_check_branch
          %198 = sbr.rel (%p196) target = $region24
        $region23: #{tpu_custom_call.1} parent=11 // pred_region
          %200 = vsyncadd [#allocation9], 0
          %s201 = sshll.u32 %s3, 4
          %s202 = int_to_ptr.hbm [resolvable:$true] %s201
          %s203 = sshll.u32 [#allocation8], 4
          %s204 = int_to_ptr.vmem [resolvable:$true] %s203
          %209 = dma.hbm_to_vmem [thread:$0]  %s202, 8192, %s204, [#allocation9], 128, 128, 8
        $region24: #{tpu_custom_call.1} parent=11 // pred_fallthru
          _
        // Predicated region
        $region25: #{tpu_custom_call.1} parent=11 // pred_check
          %p210 = pneg %p129
        $region26: #{tpu_custom_call.1} parent=11 // pred_check_branch
          %212 = sbr.rel (%p210) target = $region28
        $region27: #{tpu_custom_call.1} parent=11 // pred_region
          _
        $region28: #{tpu_custom_call.1} parent=11 // pred_fallthru
          _
      $region12: #{tpu_custom_call.1} parent=5 // pred_fallthru
        _
      %p213 = scmp.lt.s32.totalorder %s19, 2
      // Predicated region
      $region29: #{tpu_custom_call.1} parent=5 // pred_check
        %p214 = pneg %p213
      $region30: #{tpu_custom_call.1} parent=5 // pred_check_branch
        %216 = sbr.rel (%p214) target = $region32
      $region31: #{tpu_custom_call.1} parent=5 // pred_region
        // Predicated region
        $region33: #{tpu_custom_call.1} parent=31 // pred_check
          %p217 = pneg %p39
        $region34: #{tpu_custom_call.1} parent=31 // pred_check_branch
          %219 = sbr.rel (%p217) target = $region36
        $region35: #{tpu_custom_call.1} parent=31 // pred_region
          %s220 = sand.u32 %s29, 1
          %s221 = scalar_lea.sflag [#allocation3], %s220
          %s222 = sand.u32 %s29, 1
          %s223 = smul.addr %s222, 8
          %s224 = scalar_lea.vmem [#allocation2], %s223
          %226 = vsyncadd %s221, 0
          %s227 = smul.addr %s19, 8
          %s228 = scalar_lea.hbm %s0, %s227
          %s230 = sshll.u32 %s228, 4
          %s231 = int_to_ptr.hbm [resolvable:$true] %s230
          %s232 = sshll.u32 %s224, 4
          %s233 = int_to_ptr.vmem [resolvable:$true] %s232
          %235 = dma.hbm_to_vmem [thread:$0]  %s231, 128, %s233, %s221
        $region36: #{tpu_custom_call.1} parent=31 // pred_fallthru
          _
      $region32: #{tpu_custom_call.1} parent=5 // pred_fallthru
        _
      %p236 = scmp.le.s32.totalorder 1, %s19
      %p237 = scmp.lt.s32.totalorder %s19, 3
      %p238 = pnand %p236, %p237
      %p239 = pneg %p238
      // Predicated region
      $region37: #{tpu_custom_call.1} parent=5 // pred_check
        _
      $region38: #{tpu_custom_call.1} parent=5 // pred_check_branch
        %241 = sbr.rel (%p238) target = $region40
      $region39: #{tpu_custom_call.1} parent=5 // pred_region
        %s242 = ssub.s32 %s19, 1
        %s243 = sand.u32 %s32, 1
        %s244 = scalar_lea.sflag [#allocation3], %s243
        %s245 = sand.u32 %s32, 1
        %s246 = smul.addr %s245, 8
        %s247 = scalar_lea.vmem [#allocation2], %s246
        // Predicated region
        $region41: #{tpu_custom_call.1} parent=39 // pred_check
          %p248 = pneg %p45
        $region42: #{tpu_custom_call.1} parent=39 // pred_check_branch
          %250 = sbr.rel (%p248) target = $region44
        $region43: #{tpu_custom_call.1} parent=39 // pred_region
          %252 = dma.done %s244, 128
        $region44: #{tpu_custom_call.1} parent=39 // pred_fallthru
          _
        // Predicated region
        $region45: #{tpu_custom_call.1} parent=39 // pred_check
          %p253 = pneg %p66
        $region46: #{tpu_custom_call.1} parent=39 // pred_check_branch
          %255 = sbr.rel (%p253) target = $region48
        $region47: #{tpu_custom_call.1} parent=39 // pred_region
          %257 = dma.done [#allocation6], 8192
        $region48: #{tpu_custom_call.1} parent=39 // pred_fallthru
          _
        // Predicated region
        $region49: #{tpu_custom_call.1} parent=39 // pred_check
          %p258 = pneg %p87
        $region50: #{tpu_custom_call.1} parent=39 // pred_check_branch
          %260 = sbr.rel (%p258) target = $region52
        $region51: #{tpu_custom_call.1} parent=39 // pred_region
          %262 = dma.done [#allocation6], 64
        $region52: #{tpu_custom_call.1} parent=39 // pred_fallthru
          _
        // Predicated region
        $region53: #{tpu_custom_call.1} parent=39 // pred_check
          %p263 = pneg %p108
        $region54: #{tpu_custom_call.1} parent=39 // pred_check_branch
          %265 = sbr.rel (%p263) target = $region56
        $region55: #{tpu_custom_call.1} parent=39 // pred_region
          %267 = dma.done [#allocation9], 8192
        $region56: #{tpu_custom_call.1} parent=39 // pred_fallthru
          _
        %s268 = sand.u32 %s32, 1
        %s269 = scalar_lea.sflag [#allocation3], %s268
        %s270 = sand.u32 %s32, 1
        %s271 = smul.addr %s270, 8
        %s272 = scalar_lea.vmem [#allocation2], %s271
        %p273 = pneg %p45
        %p274 = pneg %p42
        %p275 = pneg %p66
        %p276 = pneg %p63
        %p277 = pneg %p87
        %p278 = pneg %p84
        %p279 = pneg %p108
        %p280 = pneg %p105
        %p281 = pneg %p129
        %p282 = pneg %p126
        %p283 = pneg %p155
        %p284 = pneg %p152
        %s285 = sand.u32 %s142, 1
        %s286 = scalar_lea.sflag [#allocation4], %s285
        %s287 = sand.u32 %s142, 1
        %s288 = smul.addr %s287, 8
        %s289 = scalar_lea.vmem [#allocation10], %s288
        %v290 = vld [vmem:[%s247] sm:$0xff]
        %v291 = vld [vmem:[#allocation5] sm:$0xff]
        %v292 = vld [vmem:[#allocation5 + $0x8] sm:$0xff]
        %v293 = vld [vmem:[#allocation5 + $0x10] sm:$0xff]
        %v294 = vld [vmem:[#allocation5 + $0x18] sm:$0xff]
        %v295 = vld [vmem:[#allocation5 + $0x20] sm:$0xff]
        %v296 = vld [vmem:[#allocation5 + $0x28] sm:$0xff]
        %v297 = vld [vmem:[#allocation5 + $0x30] sm:$0xff]
        %v298 = vld [vmem:[#allocation5 + $0x38] sm:$0xff]
        %v299 = vld [vmem:[#allocation5 + $0x40] sm:$0xff]
        %v300 = vld [vmem:[#allocation5 + $0x48] sm:$0xff]
        %v301 = vld [vmem:[#allocation5 + $0x50] sm:$0xff]
        %v302 = vld [vmem:[#allocation5 + $0x58] sm:$0xff]
        %v303 = vld [vmem:[#allocation5 + $0x60] sm:$0xff]
        %v304 = vld [vmem:[#allocation5 + $0x68] sm:$0xff]
        %v305 = vld [vmem:[#allocation5 + $0x70] sm:$0xff]
        %v306 = vld [vmem:[#allocation5 + $0x78] sm:$0xff]
        %v307 = vld [vmem:[#allocation5 + $0x80] sm:$0xff]
        %v308 = vld [vmem:[#allocation5 + $0x88] sm:$0xff]
        %v309 = vld [vmem:[#allocation5 + $0x90] sm:$0xff]
        %v310 = vld [vmem:[#allocation5 + $0x98] sm:$0xff]
        %v311 = vld [vmem:[#allocation5 + $0xa0] sm:$0xff]
        %v312 = vld [vmem:[#allocation5 + $0xa8] sm:$0xff]
        %v313 = vld [vmem:[#allocation5 + $0xb0] sm:$0xff]
        %v314 = vld [vmem:[#allocation5 + $0xb8] sm:$0xff]
        %v315 = vld [vmem:[#allocation5 + $0xc0] sm:$0xff]
        %v316 = vld [vmem:[#allocation5 + $0xc8] sm:$0xff]
        %v317 = vld [vmem:[#allocation5 + $0xd0] sm:$0xff]
        %v318 = vld [vmem:[#allocation5 + $0xd8] sm:$0xff]
        %v319 = vld [vmem:[#allocation5 + $0xe0] sm:$0xff]
        %v320 = vld [vmem:[#allocation5 + $0xe8] sm:$0xff]
        %v321 = vld [vmem:[#allocation5 + $0xf0] sm:$0xff]
        %v322 = vld [vmem:[#allocation5 + $0xf8] sm:$0xff]
        %v323 = vld [vmem:[#allocation5 + $0x100] sm:$0xff]
        %v324 = vld [vmem:[#allocation5 + $0x108] sm:$0xff]
        %v325 = vld [vmem:[#allocation5 + $0x110] sm:$0xff]
        %v326 = vld [vmem:[#allocation5 + $0x118] sm:$0xff]
        %v327 = vld [vmem:[#allocation5 + $0x120] sm:$0xff]
        %v328 = vld [vmem:[#allocation5 + $0x128] sm:$0xff]
        %v329 = vld [vmem:[#allocation5 + $0x130] sm:$0xff]
        %v330 = vld [vmem:[#allocation5 + $0x138] sm:$0xff]
        %v331 = vld [vmem:[#allocation5 + $0x140] sm:$0xff]
        %v332 = vld [vmem:[#allocation5 + $0x148] sm:$0xff]
        %v333 = vld [vmem:[#allocation5 + $0x150] sm:$0xff]
        %v334 = vld [vmem:[#allocation5 + $0x158] sm:$0xff]
        %v335 = vld [vmem:[#allocation5 + $0x160] sm:$0xff]
        %v336 = vld [vmem:[#allocation5 + $0x168] sm:$0xff]
        %v337 = vld [vmem:[#allocation5 + $0x170] sm:$0xff]
        %v338 = vld [vmem:[#allocation5 + $0x178] sm:$0xff]
        %v339 = vld [vmem:[#allocation5 + $0x180] sm:$0xff]
        %v340 = vld [vmem:[#allocation5 + $0x188] sm:$0xff]
        %v341 = vld [vmem:[#allocation5 + $0x190] sm:$0xff]
        %v342 = vld [vmem:[#allocation5 + $0x198] sm:$0xff]
        %v343 = vld [vmem:[#allocation5 + $0x1a0] sm:$0xff]
        %v344 = vld [vmem:[#allocation5 + $0x1a8] sm:$0xff]
        %v345 = vld [vmem:[#allocation5 + $0x1b0] sm:$0xff]
        %v346 = vld [vmem:[#allocation5 + $0x1b8] sm:$0xff]
        %v347 = vld [vmem:[#allocation5 + $0x1c0] sm:$0xff]
        %v348 = vld [vmem:[#allocation5 + $0x1c8] sm:$0xff]
        %v349 = vld [vmem:[#allocation5 + $0x1d0] sm:$0xff]
        %v350 = vld [vmem:[#allocation5 + $0x1d8] sm:$0xff]
        %v351 = vld [vmem:[#allocation5 + $0x1e0] sm:$0xff]
        %v352 = vld [vmem:[#allocation5 + $0x1e8] sm:$0xff]
        %v353 = vld [vmem:[#allocation5 + $0x1f0] sm:$0xff]
        %v354 = vld [vmem:[#allocation5 + $0x1f8] sm:$0xff]
        %v355 = vld [vmem:[#allocation7] sm:$0xf]
        %v357 = vperm.slane %v355, 0
        %v358 = vperm.slane %v355, 1
        %v359 = vperm.slane %v355, 2
        %v360 = vperm.slane %v355, 3
        %365 = vmatpush.msra.mxu0 %v351
        %366 = vmatpush.msra.mxu0 %v347
        %367 = vmatpush.msra.mxu0 %v343
        %368 = vmatpush.msra.mxu0 %v339
        %369 = vmatpush.msra.mxu0 %v335
        %370 = vmatpush.msra.mxu0 %v331
        %371 = vmatpush.msra.mxu0 %v327
        %372 = vmatpush.msra.mxu0 %v323
        %373 = vmatpush.msra.mxu0 %v319
        %374 = vmatpush.msra.mxu0 %v315
        %375 = vmatpush.msra.mxu0 %v311
        %376 = vmatpush.msra.mxu0 %v307
        %377 = vmatpush.msra.mxu0 %v303
        %378 = vmatpush.msra.mxu0 %v299
        %379 = vmatpush.msra.mxu0 %v295
        %380 = vmatpush.msra.mxu0 %v291
        %381 = vmatmul.f32.gmra.mxu0 %v290
        %v382 = vpop.f32.mrf.mxu0
        %v383 = vadd.f32 %v357, %v382
        %384 = vdwg.mxu0
        %385 = vmatpush.msra.mxu0 %v352
        %386 = vmatpush.msra.mxu0 %v348
        %387 = vmatpush.msra.mxu0 %v344
        %388 = vmatpush.msra.mxu0 %v340
        %389 = vmatpush.msra.mxu0 %v336
        %390 = vmatpush.msra.mxu0 %v332
        %391 = vmatpush.msra.mxu0 %v328
        %392 = vmatpush.msra.mxu0 %v324
        %393 = vmatpush.msra.mxu0 %v320
        %394 = vmatpush.msra.mxu0 %v316
        %395 = vmatpush.msra.mxu0 %v312
        %396 = vmatpush.msra.mxu0 %v308
        %397 = vmatpush.msra.mxu0 %v304
        %398 = vmatpush.msra.mxu0 %v300
        %399 = vmatpush.msra.mxu0 %v296
        %400 = vmatpush.msra.mxu0 %v292
        %401 = vmatmul.f32.gmra.mxu0 %v290
        %v402 = vpop.f32.mrf.mxu0
        %v403 = vadd.f32 %v358, %v402
        %404 = vdwg.mxu0
        %405 = vmatpush.msra.mxu0 %v353
        %406 = vmatpush.msra.mxu0 %v349
        %407 = vmatpush.msra.mxu0 %v345
        %408 = vmatpush.msra.mxu0 %v341
        %409 = vmatpush.msra.mxu0 %v337
        %410 = vmatpush.msra.mxu0 %v333
        %411 = vmatpush.msra.mxu0 %v329
        %412 = vmatpush.msra.mxu0 %v325
        %413 = vmatpush.msra.mxu0 %v321
        %414 = vmatpush.msra.mxu0 %v317
        %415 = vmatpush.msra.mxu0 %v313
        %416 = vmatpush.msra.mxu0 %v309
        %417 = vmatpush.msra.mxu0 %v305
        %418 = vmatpush.msra.mxu0 %v301
        %419 = vmatpush.msra.mxu0 %v297
        %420 = vmatpush.msra.mxu0 %v293
        %421 = vmatmul.f32.gmra.mxu0 %v290
        %v422 = vpop.f32.mrf.mxu0
        %v423 = vadd.f32 %v359, %v422
        %424 = vdwg.mxu0
        %425 = vmatpush.msra.mxu0 %v354
        %426 = vmatpush.msra.mxu0 %v350
        %427 = vmatpush.msra.mxu0 %v346
        %428 = vmatpush.msra.mxu0 %v342
        %429 = vmatpush.msra.mxu0 %v338
        %430 = vmatpush.msra.mxu0 %v334
        %431 = vmatpush.msra.mxu0 %v330
        %432 = vmatpush.msra.mxu0 %v326
        %433 = vmatpush.msra.mxu0 %v322
        %434 = vmatpush.msra.mxu0 %v318
        %435 = vmatpush.msra.mxu0 %v314
        %436 = vmatpush.msra.mxu0 %v310
        %437 = vmatpush.msra.mxu0 %v306
        %438 = vmatpush.msra.mxu0 %v302
        %439 = vmatpush.msra.mxu0 %v298
        %440 = vmatpush.msra.mxu0 %v294
        %441 = vmatmul.f32.gmra.mxu0 %v290
        %v442 = vpop.f32.mrf.mxu0
        %v443 = vadd.f32 %v360, %v442
        %444 = vdwg.mxu0
        %v445 = vmax.f32 %v383, 0.0
        %v446 = vmax.f32 %v403, 0.0
        %v447 = vmax.f32 %v423, 0.0
        %v448 = vmax.f32 %v443, 0.0
        %v449 = vld [vmem:[#allocation8] sm:$0xff]
        %v450 = vld [vmem:[#allocation8 + $0x8] sm:$0xff]
        %v451 = vld [vmem:[#allocation8 + $0x10] sm:$0xff]
        %v452 = vld [vmem:[#allocation8 + $0x18] sm:$0xff]
        %v453 = vld [vmem:[#allocation8 + $0x20] sm:$0xff]
        %v454 = vld [vmem:[#allocation8 + $0x28] sm:$0xff]
        %v455 = vld [vmem:[#allocation8 + $0x30] sm:$0xff]
        %v456 = vld [vmem:[#allocation8 + $0x38] sm:$0xff]
        %v457 = vld [vmem:[#allocation8 + $0x40] sm:$0xff]
        %v458 = vld [vmem:[#allocation8 + $0x48] sm:$0xff]
        %v459 = vld [vmem:[#allocation8 + $0x50] sm:$0xff]
        %v460 = vld [vmem:[#allocation8 + $0x58] sm:$0xff]
        %v461 = vld [vmem:[#allocation8 + $0x60] sm:$0xff]
        %v462 = vld [vmem:[#allocation8 + $0x68] sm:$0xff]
        %v463 = vld [vmem:[#allocation8 + $0x70] sm:$0xff]
        %v464 = vld [vmem:[#allocation8 + $0x78] sm:$0xff]
        %v465 = vld [vmem:[#allocation8 + $0x80] sm:$0xff]
        %v466 = vld [vmem:[#allocation8 + $0x88] sm:$0xff]
        %v467 = vld [vmem:[#allocation8 + $0x90] sm:$0xff]
        %v468 = vld [vmem:[#allocation8 + $0x98] sm:$0xff]
        %v469 = vld [vmem:[#allocation8 + $0xa0] sm:$0xff]
        %v470 = vld [vmem:[#allocation8 + $0xa8] sm:$0xff]
        %v471 = vld [vmem:[#allocation8 + $0xb0] sm:$0xff]
        %v472 = vld [vmem:[#allocation8 + $0xb8] sm:$0xff]
        %v473 = vld [vmem:[#allocation8 + $0xc0] sm:$0xff]
        %v474 = vld [vmem:[#allocation8 + $0xc8] sm:$0xff]
        %v475 = vld [vmem:[#allocation8 + $0xd0] sm:$0xff]
        %v476 = vld [vmem:[#allocation8 + $0xd8] sm:$0xff]
        %v477 = vld [vmem:[#allocation8 + $0xe0] sm:$0xff]
        %v478 = vld [vmem:[#allocation8 + $0xe8] sm:$0xff]
        %v479 = vld [vmem:[#allocation8 + $0xf0] sm:$0xff]
        %v480 = vld [vmem:[#allocation8 + $0xf8] sm:$0xff]
        %v481 = vld [vmem:[#allocation8 + $0x100] sm:$0xff]
        %v482 = vld [vmem:[#allocation8 + $0x108] sm:$0xff]
        %v483 = vld [vmem:[#allocation8 + $0x110] sm:$0xff]
        %v484 = vld [vmem:[#allocation8 + $0x118] sm:$0xff]
        %v485 = vld [vmem:[#allocation8 + $0x120] sm:$0xff]
        %v486 = vld [vmem:[#allocation8 + $0x128] sm:$0xff]
        %v487 = vld [vmem:[#allocation8 + $0x130] sm:$0xff]
        %v488 = vld [vmem:[#allocation8 + $0x138] sm:$0xff]
        %v489 = vld [vmem:[#allocation8 + $0x140] sm:$0xff]
        %v490 = vld [vmem:[#allocation8 + $0x148] sm:$0xff]
        %v491 = vld [vmem:[#allocation8 + $0x150] sm:$0xff]
        %v492 = vld [vmem:[#allocation8 + $0x158] sm:$0xff]
        %v493 = vld [vmem:[#allocation8 + $0x160] sm:$0xff]
        %v494 = vld [vmem:[#allocation8 + $0x168] sm:$0xff]
        %v495 = vld [vmem:[#allocation8 + $0x170] sm:$0xff]
        %v496 = vld [vmem:[#allocation8 + $0x178] sm:$0xff]
        %v497 = vld [vmem:[#allocation8 + $0x180] sm:$0xff]
        %v498 = vld [vmem:[#allocation8 + $0x188] sm:$0xff]
        %v499 = vld [vmem:[#allocation8 + $0x190] sm:$0xff]
        %v500 = vld [vmem:[#allocation8 + $0x198] sm:$0xff]
        %v501 = vld [vmem:[#allocation8 + $0x1a0] sm:$0xff]
        %v502 = vld [vmem:[#allocation8 + $0x1a8] sm:$0xff]
        %v503 = vld [vmem:[#allocation8 + $0x1b0] sm:$0xff]
        %v504 = vld [vmem:[#allocation8 + $0x1b8] sm:$0xff]
        %v505 = vld [vmem:[#allocation8 + $0x1c0] sm:$0xff]
        %v506 = vld [vmem:[#allocation8 + $0x1c8] sm:$0xff]
        %v507 = vld [vmem:[#allocation8 + $0x1d0] sm:$0xff]
        %v508 = vld [vmem:[#allocation8 + $0x1d8] sm:$0xff]
        %v509 = vld [vmem:[#allocation8 + $0x1e0] sm:$0xff]
        %v510 = vld [vmem:[#allocation8 + $0x1e8] sm:$0xff]
        %v511 = vld [vmem:[#allocation8 + $0x1f0] sm:$0xff]
        %v512 = vld [vmem:[#allocation8 + $0x1f8] sm:$0xff]
        %v513 = vld [vmem:[%s4] sm:$0x1]
        %v515 = vperm.slane %v513, 0
        %517 = vmatpush.msra.mxu0 %v464
        %518 = vmatpush.msra.mxu0 %v463
        %519 = vmatpush.msra.mxu0 %v462
        %520 = vmatpush.msra.mxu0 %v461
        %521 = vmatpush.msra.mxu0 %v460
        %522 = vmatpush.msra.mxu0 %v459
        %523 = vmatpush.msra.mxu0 %v458
        %524 = vmatpush.msra.mxu0 %v457
        %525 = vmatpush.msra.mxu0 %v456
        %526 = vmatpush.msra.mxu0 %v455
        %527 = vmatpush.msra.mxu0 %v454
        %528 = vmatpush.msra.mxu0 %v453
        %529 = vmatpush.msra.mxu0 %v452
        %530 = vmatpush.msra.mxu0 %v451
        %531 = vmatpush.msra.mxu0 %v450
        %532 = vmatpush.msra.mxu0 %v449
        %533 = vmatmul.f32.gmra.mxu0 %v445
        %v534 = vpop.f32.mrf.mxu0
        %v535 = vadd.f32 %v515, %v534
        %536 = vdwg.mxu0
        %537 = vmatpush.msra.mxu0 %v480
        %538 = vmatpush.msra.mxu0 %v479
        %539 = vmatpush.msra.mxu0 %v478
        %540 = vmatpush.msra.mxu0 %v477
        %541 = vmatpush.msra.mxu0 %v476
        %542 = vmatpush.msra.mxu0 %v475
        %543 = vmatpush.msra.mxu0 %v474
        %544 = vmatpush.msra.mxu0 %v473
        %545 = vmatpush.msra.mxu0 %v472
        %546 = vmatpush.msra.mxu0 %v471
        %547 = vmatpush.msra.mxu0 %v470
        %548 = vmatpush.msra.mxu0 %v469
        %549 = vmatpush.msra.mxu0 %v468
        %550 = vmatpush.msra.mxu0 %v467
        %551 = vmatpush.msra.mxu0 %v466
        %552 = vmatpush.msra.mxu0 %v465
        %553 = vmatmul.f32.gmra.mxu0 %v446
        %v554 = vpop.f32.mrf.mxu0
        %v555 = vadd.f32 %v535, %v554
        %556 = vdwg.mxu0
        %557 = vmatpush.msra.mxu0 %v496
        %558 = vmatpush.msra.mxu0 %v495
        %559 = vmatpush.msra.mxu0 %v494
        %560 = vmatpush.msra.mxu0 %v493
        %561 = vmatpush.msra.mxu0 %v492
        %562 = vmatpush.msra.mxu0 %v491
        %563 = vmatpush.msra.mxu0 %v490
        %564 = vmatpush.msra.mxu0 %v489
        %565 = vmatpush.msra.mxu0 %v488
        %566 = vmatpush.msra.mxu0 %v487
        %567 = vmatpush.msra.mxu0 %v486
        %568 = vmatpush.msra.mxu0 %v485
        %569 = vmatpush.msra.mxu0 %v484
        %570 = vmatpush.msra.mxu0 %v483
        %571 = vmatpush.msra.mxu0 %v482
        %572 = vmatpush.msra.mxu0 %v481
        %573 = vmatmul.f32.gmra.mxu0 %v447
        %v574 = vpop.f32.mrf.mxu0
        %v575 = vadd.f32 %v555, %v574
        %576 = vdwg.mxu0
        %577 = vmatpush.msra.mxu0 %v512
        %578 = vmatpush.msra.mxu0 %v511
        %579 = vmatpush.msra.mxu0 %v510
        %580 = vmatpush.msra.mxu0 %v509
        %581 = vmatpush.msra.mxu0 %v508
        %582 = vmatpush.msra.mxu0 %v507
        %583 = vmatpush.msra.mxu0 %v506
        %584 = vmatpush.msra.mxu0 %v505
        %585 = vmatpush.msra.mxu0 %v504
        %586 = vmatpush.msra.mxu0 %v503
        %587 = vmatpush.msra.mxu0 %v502
        %588 = vmatpush.msra.mxu0 %v501
        %589 = vmatpush.msra.mxu0 %v500
        %590 = vmatpush.msra.mxu0 %v499
        %591 = vmatpush.msra.mxu0 %v498
        %592 = vmatpush.msra.mxu0 %v497
        %593 = vmatmul.f32.gmra.mxu0 %v448
        %v594 = vpop.f32.mrf.mxu0
        %v595 = vadd.f32 %v575, %v594
        %596 = vdwg.mxu0
        %597 = vst [vmem:[%s289] sm:$0xff] %v595
        %s598 = sand.u32 %s142, 1
        %s599 = scalar_lea.sflag [#allocation4], %s598
        %s600 = sand.u32 %s142, 1
        %s601 = smul.addr %s600, 8
        %s602 = scalar_lea.vmem [#allocation10], %s601
        // Predicated region
        $region57: #{tpu_custom_call.1} parent=39 // pred_check
          %p603 = pneg %p152
        $region58: #{tpu_custom_call.1} parent=39 // pred_check_branch
          %605 = sbr.rel (%p603) target = $region60
        $region59: #{tpu_custom_call.1} parent=39 // pred_region
          %607 = vsyncadd %s599, 0
          %s608 = smul.addr %s24, 8
          %s609 = scalar_lea.hbm %s5, %s608
          %s611 = sshll.u32 %s602, 4
          %s612 = int_to_ptr.vmem [resolvable:$true] %s611
          %s613 = sshll.u32 %s609, 4
          %s614 = int_to_ptr.hbm [resolvable:$true] %s613
          %616 = dma.vmem_to_hbm [thread:$0]  %s612, 128, %s614, %s599
        $region60: #{tpu_custom_call.1} parent=39 // pred_fallthru
          _
      $region40: #{tpu_custom_call.1} parent=5 // pred_fallthru
        _
      %p617 = scmp.le.s32.totalorder 2, %s19
      // Predicated region
      $region61: #{tpu_custom_call.1} parent=5 // pred_check
        %p618 = pneg %p617
      $region62: #{tpu_custom_call.1} parent=5 // pred_check_branch
        %620 = sbr.rel (%p618) target = $region64
      $region63: #{tpu_custom_call.1} parent=5 // pred_region
        %s621 = ssub.s32 %s19, 2
        // Predicated region
        $region65: #{tpu_custom_call.1} parent=63 // pred_check
          %p622 = pneg %p158
        $region66: #{tpu_custom_call.1} parent=63 // pred_check_branch
          %624 = sbr.rel (%p622) target = $region68
        $region67: #{tpu_custom_call.1} parent=63 // pred_region
          %s625 = sand.u32 %s143, 1
          %s626 = scalar_lea.sflag [#allocation4], %s625
          %s627 = sand.u32 %s143, 1
          %s628 = smul.addr %s627, 8
          %s629 = scalar_lea.vmem [#allocation10], %s628
          %631 = dma.done %s626, 128
        $region68: #{tpu_custom_call.1} parent=63 // pred_fallthru
          _
      $region64: #{tpu_custom_call.1} parent=5 // pred_fallthru
        _
    $region6: #{tpu_custom_call.1} parent=1 // loop_footer
      %s23 = sadd.s32 1, %s19
    $region7: #{tpu_custom_call.1} parent=1 // loop_footer_branch
      %18 = sbr.rel target = $region3
    $region8: #{tpu_custom_call.1} parent=1 // loop_exit
      _
    %632 = vsyncpa [#allocation3], 1
    %s633 = scalar_lea.sflag [#allocation3], 1
    %634 = vsyncpa %s633, 1
    %635 = vsyncpa [#allocation6], 1
    %636 = vsyncpa [#allocation9], 1
    %637 = vsyncpa [#allocation4], 1
    %s638 = scalar_lea.sflag [#allocation4], 1
    %639 = vsyncpa %s638, 1

</llo_original>
